<compile_context>
chip_gen: v6e
topology: v6e:2x2x1
jax: 0.10.0
libtpu: 0.0.40
codegen_flags: <defaults>
</compile_context>

<pallas_src>
import functools
import math

import jax
import jax.numpy as jnp
from jax.experimental import pallas as pl
from jax.experimental.pallas import tpu as pltpu


def _round_up(n: int, m: int) -> int:
    return ((n + m - 1) // m) * m


def rnn_kernel(x_ref, wih_ref, whh_ref, b_ref, wfc_ref, bfc_ref, out_ref,
               xw_ref, *, seq_len: int):
    # x_ref:   (T, Bt, I)  time-major batch tile
    # wih_ref: (I, H)      whh_ref: (H, H)   b_ref: (1, H)  (= b_ih + b_hh)
    # wfc_ref: (H, O)      bfc_ref: (1, O)
    # out_ref: (Bt, O)
    # xw_ref:  (T, Bt, H)  VMEM scratch holding the hoisted input projection
    T = seq_len
    Bt = out_ref.shape[0]
    I = wih_ref.shape[0]
    H = whh_ref.shape[0]

    # (1) Hoisted input projection: one large MXU matmul for all timesteps of
    #     this batch tile, bias folded in.  The (T, Bt, I) -> (T*Bt, I) reshape
    #     only merges leading/sublane dims (lane dim untouched) -> no relayout.
    x2d = x_ref[...].reshape(T * Bt, I)
    xw = jnp.dot(x2d, wih_ref[...], preferred_element_type=jnp.float32) + b_ref[...]
    xw_ref[...] = xw.reshape(T, Bt, H)

    # W_hh is small (<= 128x128 padded) -> keep as a hoisted value.
    whh = whh_ref[...]

    # (2) Serial recurrence: per step one contiguous (Bt, H) load from the
    #     scratch (leading-dim index, 8-aligned, unmasked), one MXU matmul,
    #     one tanh on the EUP.  T is small & static -> full unroll so the LLO
    #     scheduler can overlap step t's tanh with step t+1's MXU push.
    h = jnp.zeros((Bt, H), dtype=jnp.float32)
    for t in range(T):
        xw_t = xw_ref[t]                              # (Bt, H), contiguous
        h = jnp.tanh(xw_t + jnp.dot(h, whh, preferred_element_type=jnp.float32))

    # (3) Epilogue: out = ReLU(h_T) @ W_fc + b_fc   (lane-dense padded output).
    h_relu = jnp.maximum(h, 0.0)
    out_ref[...] = (
        jnp.dot(h_relu, wfc_ref[...], preferred_element_type=jnp.float32)
        + bfc_ref[...]
    ).astype(out_ref.dtype)


@jax.jit
def rnn_forward(x, w_ih, w_hh, b_ih, b_hh, w_fc, b_fc):
    """x: (B, T, input_size) float32 (PyTorch batch_first convention).

    Weights are in PyTorch layout:
      w_ih: (H, I), w_hh: (H, H), b_ih/b_hh: (H,), w_fc: (O, H), b_fc: (O,)
    """
    B, T, I = x.shape
    H = w_hh.shape[0]
    O = w_fc.shape[0]

    # (8, 128)-aligned padding.  Zero-padded weight rows/cols + zero-padded
    # bias lanes + tanh(0)=0 keep the padded hidden lanes identically zero
    # through the recurrence; padded batch rows are sliced off at the end.
    B_pad = _round_up(B, 8)
    I_pad = _round_up(I, 128)
    H_pad = _round_up(H, 128)
    O_pad = _round_up(O, 128)

    B_TILE = 8                       # batch tile per grid step (>=8 sublanes);
    n_btiles = B_pad // B_TILE       # bump tile size at real batch sizes.

    # Time-major padded input: (T, B_pad, I_pad).  One-time reorder in the
    # wrapper keeps the per-step kernel reads contiguous and 8-aligned.
    x_tm = jnp.zeros((T, B_pad, I_pad), jnp.float32)
    x_tm = x_tm.at[:, :B, :I].set(jnp.transpose(x.astype(jnp.float32), (1, 0, 2)))

    wih_p = jnp.zeros((I_pad, H_pad), jnp.float32).at[:I, :H].set(
        jnp.transpose(w_ih).astype(jnp.float32))
    whh_p = jnp.zeros((H_pad, H_pad), jnp.float32).at[:H, :H].set(
        jnp.transpose(w_hh).astype(jnp.float32))
    b_p = jnp.zeros((1, H_pad), jnp.float32).at[0, :H].set(
        (b_ih + b_hh).astype(jnp.float32))
    wfc_p = jnp.zeros((H_pad, O_pad), jnp.float32).at[:H, :O].set(
        jnp.transpose(w_fc).astype(jnp.float32))
    bfc_p = jnp.zeros((1, O_pad), jnp.float32).at[0, :O].set(
        b_fc.astype(jnp.float32))

    flops = (2 * B_pad * T * I_pad * H_pad        # input projection
             + 2 * T * B_pad * H_pad * H_pad      # recurrence
             + 2 * B_pad * H_pad * O_pad)         # fc
    transcendentals = B_pad * T * H_pad           # tanh
    bytes_accessed = 4 * (T * B_pad * I_pad + I_pad * H_pad + H_pad * H_pad
                          + H_pad + H_pad * O_pad + O_pad + B_pad * O_pad)

    out_p = pl.pallas_call(
        functools.partial(rnn_kernel, seq_len=T),
        out_shape=jax.ShapeDtypeStruct((B_pad, O_pad), jnp.float32),
        grid_spec=pltpu.PrefetchScalarGridSpec(
            num_scalar_prefetch=0,
            grid=(n_btiles,),
            in_specs=[
                pl.BlockSpec((T, B_TILE, I_pad), lambda j: (0, j, 0)),  # x (time-major)
                pl.BlockSpec((I_pad, H_pad), lambda j: (0, 0)),         # W_ih^T
                pl.BlockSpec((H_pad, H_pad), lambda j: (0, 0)),         # W_hh^T
                pl.BlockSpec((1, H_pad), lambda j: (0, 0)),             # b_ih + b_hh
                pl.BlockSpec((H_pad, O_pad), lambda j: (0, 0)),         # W_fc^T
                pl.BlockSpec((1, O_pad), lambda j: (0, 0)),             # b_fc
            ],
            out_specs=pl.BlockSpec((B_TILE, O_pad), lambda j: (j, 0)),
            scratch_shapes=[pltpu.VMEM((T, B_TILE, H_pad), jnp.float32)],
        ),
        compiler_params=pltpu.CompilerParams(
            dimension_semantics=("parallel",),       # batch tiles are independent
            vmem_limit_bytes=32 * 1024 * 1024,       # v5e scoped default is 16 MiB
        ),
        cost_estimate=pl.CostEstimate(
            flops=flops,
            transcendentals=transcendentals,
            bytes_accessed=bytes_accessed,
        ),
    )(x_tm, wih_p, whh_p, b_p, wfc_p, bfc_p)

    return out_p[:B, :O]


def init_params(key, input_size, hidden_size, output_size):
    """Deterministic init mimicking PyTorch's uniform(-1/sqrt(fan), 1/sqrt(fan))."""
    k = jax.random.split(key, 6)
    s_rnn = 1.0 / math.sqrt(hidden_size)
    s_fc = 1.0 / math.sqrt(hidden_size)
    w_ih = jax.random.uniform(k[0], (hidden_size, input_size), jnp.float32, -s_rnn, s_rnn)
    w_hh = jax.random.uniform(k[1], (hidden_size, hidden_size), jnp.float32, -s_rnn, s_rnn)
    b_ih = jax.random.uniform(k[2], (hidden_size,), jnp.float32, -s_rnn, s_rnn)
    b_hh = jax.random.uniform(k[3], (hidden_size,), jnp.float32, -s_rnn, s_rnn)
    w_fc = jax.random.uniform(k[4], (output_size, hidden_size), jnp.float32, -s_fc, s_fc)
    b_fc = jax.random.uniform(k[5], (output_size,), jnp.float32, -s_fc, s_fc)
    return w_ih, w_hh, b_ih, b_hh, w_fc, b_fc


def reference_forward(x, w_ih, w_hh, b_ih, b_hh, w_fc, b_fc):
    """Pure-JAX reference for correctness checking."""
    B, T, _ = x.shape
    H = w_hh.shape[0]
    h = jnp.zeros((B, H), jnp.float32)
    for t in range(T):
        h = jnp.tanh(x[:, t, :] @ w_ih.T + b_ih + h @ w_hh.T + b_hh)
    return jnp.maximum(h, 0.0) @ w_fc.T + b_fc


if __name__ == "__main__":
    B, T = 2, 8
    input_size, hidden_size, output_size = 16, 32, 8

    key = jax.random.PRNGKey(0)
    kx, kp = jax.random.split(key)
    x = jax.random.normal(kx, (B, T, input_size), jnp.float32)
    params = init_params(kp, input_size, hidden_size, output_size)

    out = rnn_forward(x, *params)
    out = jax.block_until_ready(out)

    ref = reference_forward(x, *params)
    assert out.shape == (B, output_size)
    assert jnp.allclose(out, ref, atol=1e-4, rtol=1e-4), "mismatch vs reference"
    print("KERNEL_OK")
</pallas_src>

<mosaic_0001>
module attributes {stable_mosaic.version = 11 : i64} {
  func.func @rnn_kernel(%arg0: i32, %arg1: memref<8x8x128xf32, #tpu.memory_space<vmem>>, %arg2: memref<128x128xf32, #tpu.memory_space<vmem>>, %arg3: memref<128x128xf32, #tpu.memory_space<vmem>>, %arg4: memref<1x128xf32, #tpu.memory_space<vmem>>, %arg5: memref<128x128xf32, #tpu.memory_space<vmem>>, %arg6: memref<1x128xf32, #tpu.memory_space<vmem>>, %arg7: memref<8x128xf32, #tpu.memory_space<vmem>>, %arg8: memref<8x8x128xf32, #tpu.memory_space<vmem>>) attributes {dimension_semantics = [#tpu.dimension_semantics<parallel>], iteration_bounds = array<i64: 1>, scalar_prefetch = 0 : i64, scratch_operands = 1 : i64, tpu.core_type = #tpu.core_type<tc>, window_params = [{transform_indices = @transform_0, window_bounds = array<i64: 8, 8, 128>}, {pipeline_mode = #tpu.pipeline_mode<synchronous>, transform_indices = @transform_1, window_bounds = array<i64: 128, 128>}, {pipeline_mode = #tpu.pipeline_mode<synchronous>, transform_indices = @transform_2, window_bounds = array<i64: 128, 128>}, {pipeline_mode = #tpu.pipeline_mode<synchronous>, transform_indices = @transform_3, window_bounds = array<i64: 1, 128>}, {pipeline_mode = #tpu.pipeline_mode<synchronous>, transform_indices = @transform_4, window_bounds = array<i64: 128, 128>}, {pipeline_mode = #tpu.pipeline_mode<synchronous>, transform_indices = @transform_5, window_bounds = array<i64: 1, 128>}, {transform_indices = @transform_6, window_bounds = array<i64: 8, 128>}]} {
    %c0 = arith.constant 0 : index
    %c0_0 = arith.constant 0 : index
    %c0_1 = arith.constant 0 : index
    %0 = vector.load %arg1[%c0, %c0_0, %c0_1] : memref<8x8x128xf32, #tpu.memory_space<vmem>>, vector<8x8x128xf32>
    %1 = vector.shape_cast %0 : vector<8x8x128xf32> to vector<64x128xf32>
    %c0_2 = arith.constant 0 : index
    %c0_3 = arith.constant 0 : index
    %2 = vector.load %arg2[%c0_2, %c0_3] : memref<128x128xf32, #tpu.memory_space<vmem>>, vector<128x128xf32>
    %cst = arith.constant dense<0.000000e+00> : vector<64x128xf32>
    %3 = tpu.matmul %1, %2, %cst {dimension_numbers = #tpu.dot_dimension_numbers<[1], [0], [0], [1], [0, 0, 1, 1], [], []>} : vector<64x128xf32>, vector<128x128xf32>, vector<64x128xf32> -> vector<64x128xf32>
    %c0_4 = arith.constant 0 : index
    %c0_5 = arith.constant 0 : index
    %4 = vector.load %arg4[%c0_4, %c0_5] : memref<1x128xf32, #tpu.memory_space<vmem>>, vector<1x128xf32>
    %5 = vector.broadcast %4 : vector<1x128xf32> to vector<64x128xf32>
    %6 = arith.addf %3, %5 : vector<64x128xf32>
    %7 = vector.shape_cast %6 : vector<64x128xf32> to vector<8x8x128xf32>
    %c0_6 = arith.constant 0 : index
    %c0_7 = arith.constant 0 : index
    %c0_8 = arith.constant 0 : index
    %8 = vector.load %arg8[%c0_6, %c0_7, %c0_8] : memref<8x8x128xf32, #tpu.memory_space<vmem>>, vector<8x8x128xf32>
    tpu.vector_store %arg8[%c0_6, %c0_7, %c0_8], %7 {strides = array<i32>} : memref<8x8x128xf32, #tpu.memory_space<vmem>>, vector<8x8x128xf32>,
    %c0_9 = arith.constant 0 : index
    %c0_10 = arith.constant 0 : index
    %9 = vector.load %arg3[%c0_9, %c0_10] : memref<128x128xf32, #tpu.memory_space<vmem>>, vector<128x128xf32>
    %cst_11 = arith.constant 0.000000e+00 : f32
    %10 = vector.broadcast %cst_11 : f32 to vector<8x128xf32>
    %c0_12 = arith.constant 0 : index
    %c0_13 = arith.constant 0 : index
    %c0_14 = arith.constant 0 : index
    %11 = vector.load %arg8[%c0_12, %c0_13, %c0_14] : memref<8x8x128xf32, #tpu.memory_space<vmem>>, vector<1x8x128xf32>
    %12 = vector.shape_cast %11 : vector<1x8x128xf32> to vector<8x128xf32>
    %cst_15 = arith.constant dense<0.000000e+00> : vector<8x128xf32>
    %13 = tpu.matmul %10, %9, %cst_15 {dimension_numbers = #tpu.dot_dimension_numbers<[1], [0], [0], [1], [0, 0, 1, 1], [], []>} : vector<8x128xf32>, vector<128x128xf32>, vector<8x128xf32> -> vector<8x128xf32>
    %14 = arith.addf %12, %13 : vector<8x128xf32>
    %15 = math.tanh %14 : vector<8x128xf32>
    %c1 = arith.constant 1 : index
    %c0_16 = arith.constant 0 : index
    %c0_17 = arith.constant 0 : index
    %16 = vector.load %arg8[%c1, %c0_16, %c0_17] : memref<8x8x128xf32, #tpu.memory_space<vmem>>, vector<1x8x128xf32>
    %17 = vector.shape_cast %16 : vector<1x8x128xf32> to vector<8x128xf32>
    %cst_18 = arith.constant dense<0.000000e+00> : vector<8x128xf32>
    %18 = tpu.matmul %15, %9, %cst_18 {dimension_numbers = #tpu.dot_dimension_numbers<[1], [0], [0], [1], [0, 0, 1, 1], [], []>} : vector<8x128xf32>, vector<128x128xf32>, vector<8x128xf32> -> vector<8x128xf32>
    %19 = arith.addf %17, %18 : vector<8x128xf32>
    %20 = math.tanh %19 : vector<8x128xf32>
    %c2 = arith.constant 2 : index
    %c0_19 = arith.constant 0 : index
    %c0_20 = arith.constant 0 : index
    %21 = vector.load %arg8[%c2, %c0_19, %c0_20] : memref<8x8x128xf32, #tpu.memory_space<vmem>>, vector<1x8x128xf32>
    %22 = vector.shape_cast %21 : vector<1x8x128xf32> to vector<8x128xf32>
    %cst_21 = arith.constant dense<0.000000e+00> : vector<8x128xf32>
    %23 = tpu.matmul %20, %9, %cst_21 {dimension_numbers = #tpu.dot_dimension_numbers<[1], [0], [0], [1], [0, 0, 1, 1], [], []>} : vector<8x128xf32>, vector<128x128xf32>, vector<8x128xf32> -> vector<8x128xf32>
    %24 = arith.addf %22, %23 : vector<8x128xf32>
    %25 = math.tanh %24 : vector<8x128xf32>
    %c3 = arith.constant 3 : index
    %c0_22 = arith.constant 0 : index
    %c0_23 = arith.constant 0 : index
    %26 = vector.load %arg8[%c3, %c0_22, %c0_23] : memref<8x8x128xf32, #tpu.memory_space<vmem>>, vector<1x8x128xf32>
    %27 = vector.shape_cast %26 : vector<1x8x128xf32> to vector<8x128xf32>
    %cst_24 = arith.constant dense<0.000000e+00> : vector<8x128xf32>
    %28 = tpu.matmul %25, %9, %cst_24 {dimension_numbers = #tpu.dot_dimension_numbers<[1], [0], [0], [1], [0, 0, 1, 1], [], []>} : vector<8x128xf32>, vector<128x128xf32>, vector<8x128xf32> -> vector<8x128xf32>
    %29 = arith.addf %27, %28 : vector<8x128xf32>
    %30 = math.tanh %29 : vector<8x128xf32>
    %c4 = arith.constant 4 : index
    %c0_25 = arith.constant 0 : index
    %c0_26 = arith.constant 0 : index
    %31 = vector.load %arg8[%c4, %c0_25, %c0_26] : memref<8x8x128xf32, #tpu.memory_space<vmem>>, vector<1x8x128xf32>
    %32 = vector.shape_cast %31 : vector<1x8x128xf32> to vector<8x128xf32>
    %cst_27 = arith.constant dense<0.000000e+00> : vector<8x128xf32>
    %33 = tpu.matmul %30, %9, %cst_27 {dimension_numbers = #tpu.dot_dimension_numbers<[1], [0], [0], [1], [0, 0, 1, 1], [], []>} : vector<8x128xf32>, vector<128x128xf32>, vector<8x128xf32> -> vector<8x128xf32>
    %34 = arith.addf %32, %33 : vector<8x128xf32>
    %35 = math.tanh %34 : vector<8x128xf32>
    %c5 = arith.constant 5 : index
    %c0_28 = arith.constant 0 : index
    %c0_29 = arith.constant 0 : index
    %36 = vector.load %arg8[%c5, %c0_28, %c0_29] : memref<8x8x128xf32, #tpu.memory_space<vmem>>, vector<1x8x128xf32>
    %37 = vector.shape_cast %36 : vector<1x8x128xf32> to vector<8x128xf32>
    %cst_30 = arith.constant dense<0.000000e+00> : vector<8x128xf32>
    %38 = tpu.matmul %35, %9, %cst_30 {dimension_numbers = #tpu.dot_dimension_numbers<[1], [0], [0], [1], [0, 0, 1, 1], [], []>} : vector<8x128xf32>, vector<128x128xf32>, vector<8x128xf32> -> vector<8x128xf32>
    %39 = arith.addf %37, %38 : vector<8x128xf32>
    %40 = math.tanh %39 : vector<8x128xf32>
    %c6 = arith.constant 6 : index
    %c0_31 = arith.constant 0 : index
    %c0_32 = arith.constant 0 : index
    %41 = vector.load %arg8[%c6, %c0_31, %c0_32] : memref<8x8x128xf32, #tpu.memory_space<vmem>>, vector<1x8x128xf32>
    %42 = vector.shape_cast %41 : vector<1x8x128xf32> to vector<8x128xf32>
    %cst_33 = arith.constant dense<0.000000e+00> : vector<8x128xf32>
    %43 = tpu.matmul %40, %9, %cst_33 {dimension_numbers = #tpu.dot_dimension_numbers<[1], [0], [0], [1], [0, 0, 1, 1], [], []>} : vector<8x128xf32>, vector<128x128xf32>, vector<8x128xf32> -> vector<8x128xf32>
    %44 = arith.addf %42, %43 : vector<8x128xf32>
    %45 = math.tanh %44 : vector<8x128xf32>
    %c7 = arith.constant 7 : index
    %c0_34 = arith.constant 0 : index
    %c0_35 = arith.constant 0 : index
    %46 = vector.load %arg8[%c7, %c0_34, %c0_35] : memref<8x8x128xf32, #tpu.memory_space<vmem>>, vector<1x8x128xf32>
    %47 = vector.shape_cast %46 : vector<1x8x128xf32> to vector<8x128xf32>
    %cst_36 = arith.constant dense<0.000000e+00> : vector<8x128xf32>
    %48 = tpu.matmul %45, %9, %cst_36 {dimension_numbers = #tpu.dot_dimension_numbers<[1], [0], [0], [1], [0, 0, 1, 1], [], []>} : vector<8x128xf32>, vector<128x128xf32>, vector<8x128xf32> -> vector<8x128xf32>
    %49 = arith.addf %47, %48 : vector<8x128xf32>
    %50 = math.tanh %49 : vector<8x128xf32>
    %cst_37 = arith.constant 0.000000e+00 : f32
    %51 = vector.broadcast %cst_37 : f32 to vector<8x128xf32>
    %52 = arith.maximumf %50, %51 : vector<8x128xf32>
    %c0_38 = arith.constant 0 : index
    %c0_39 = arith.constant 0 : index
    %53 = vector.load %arg5[%c0_38, %c0_39] : memref<128x128xf32, #tpu.memory_space<vmem>>, vector<128x128xf32>
    %cst_40 = arith.constant dense<0.000000e+00> : vector<8x128xf32>
    %54 = tpu.matmul %52, %53, %cst_40 {dimension_numbers = #tpu.dot_dimension_numbers<[1], [0], [0], [1], [0, 0, 1, 1], [], []>} : vector<8x128xf32>, vector<128x128xf32>, vector<8x128xf32> -> vector<8x128xf32>
    %c0_41 = arith.constant 0 : index
    %c0_42 = arith.constant 0 : index
    %55 = vector.load %arg6[%c0_41, %c0_42] : memref<1x128xf32, #tpu.memory_space<vmem>>, vector<1x128xf32>
    %56 = vector.broadcast %55 : vector<1x128xf32> to vector<8x128xf32>
    %57 = arith.addf %54, %56 : vector<8x128xf32>
    %c0_43 = arith.constant 0 : index
    %c0_44 = arith.constant 0 : index
    %58 = vector.load %arg7[%c0_43, %c0_44] : memref<8x128xf32, #tpu.memory_space<vmem>>, vector<8x128xf32>
    tpu.vector_store %arg7[%c0_43, %c0_44], %57 {strides = array<i32>} : memref<8x128xf32, #tpu.memory_space<vmem>>, vector<8x128xf32>,
    return
  }
  func.func @transform_0(%arg0: i32) -> (i32, i32, i32) {
    %c0_i32 = arith.constant 0 : i32
    %c0_i32_0 = arith.constant 0 : i32
    %c0_i32_1 = arith.constant 0 : i32
    return %c0_i32, %arg0, %c0_i32_0 : i32, i32, i32
  }
  func.func @transform_1(%arg0: i32) -> (i32, i32) {
    %c0_i32 = arith.constant 0 : i32
    %c0_i32_0 = arith.constant 0 : i32
    %c0_i32_1 = arith.constant 0 : i32
    return %c0_i32, %c0_i32_0 : i32, i32
  }
  func.func @transform_2(%arg0: i32) -> (i32, i32) {
    %c0_i32 = arith.constant 0 : i32
    %c0_i32_0 = arith.constant 0 : i32
    %c0_i32_1 = arith.constant 0 : i32
    return %c0_i32, %c0_i32_0 : i32, i32
  }
  func.func @transform_3(%arg0: i32) -> (i32, i32) {
    %c0_i32 = arith.constant 0 : i32
    %c0_i32_0 = arith.constant 0 : i32
    %c0_i32_1 = arith.constant 0 : i32
    return %c0_i32, %c0_i32_0 : i32, i32
  }
  func.func @transform_4(%arg0: i32) -> (i32, i32) {
    %c0_i32 = arith.constant 0 : i32
    %c0_i32_0 = arith.constant 0 : i32
    %c0_i32_1 = arith.constant 0 : i32
    return %c0_i32, %c0_i32_0 : i32, i32
  }
  func.func @transform_5(%arg0: i32) -> (i32, i32) {
    %c0_i32 = arith.constant 0 : i32
    %c0_i32_0 = arith.constant 0 : i32
    %c0_i32_1 = arith.constant 0 : i32
    return %c0_i32, %c0_i32_0 : i32, i32
  }
  func.func @transform_6(%arg0: i32) -> (i32, i32) {
    %c0_i32 = arith.constant 0 : i32
    %c0_i32_0 = arith.constant 0 : i32
    return %arg0, %c0_i32 : i32, i32
  }
}

</mosaic_0001>

<llo_original>
// kernel: rnn_forward.1
$region0: #{rnn_forward.1}
  #allocation0 [shape = 'u32[]', space=smem, size = 0x4, offset = 0x4, fixed_abs, tag = 'smem constant byte address 0x4 - core index']
  #allocation1 [shape = 'u32[144,128]{1,0:T(1,128)}', space=vmem, size = 0x12000, scoped, tag = 'internal scratch']
  #allocation2 [shape = 'f32[8,8,128]{2,1,0:T(8,128)}', space=vmem, size = 0x8000, scoped, tag = 'scratch operand']
  %s0 = inlined_call_operand.vmem [shape: f32[8,8,128], index: 0, kind: input, shape index: {}]
  %s1 = inlined_call_operand.vmem [shape: f32[128,128], index: 1, kind: input, shape index: {}]
  %s2 = inlined_call_operand.vmem [shape: f32[128,128], index: 2, kind: input, shape index: {}]
  %s3 = inlined_call_operand.vmem [shape: f32[1,128], index: 3, kind: input, shape index: {}]
  %s4 = inlined_call_operand.vmem [shape: f32[128,128], index: 4, kind: input, shape index: {}]
  %s5 = inlined_call_operand.vmem [shape: f32[1,128], index: 5, kind: input, shape index: {}]
  %s6 = inlined_call_operand.vmem [shape: f32[8,128], index: 6, kind: output, shape index: {}]
  %s7 = sld [smem:[#allocation0]]
  $region34: #{rnn_forward.1} parent=0
    _
  %s9 = ssub.s32 1, %s7
  %s10 = scalar_select 0, %s9, %s7
  // Predicated region
  $region2: #{rnn_forward.1} parent=0 // pred_check
    _
  $region3: #{rnn_forward.1} parent=0 // pred_check_branch
    %12 = sbr.rel (0) target = $region5
  $region4: #{rnn_forward.1} parent=0 // pred_region
    _
  $region5: #{rnn_forward.1} parent=0 // pred_fallthru
    _
  // Predicated region
  $region6: #{rnn_forward.1} parent=0 // pred_check
    _
  $region7: #{rnn_forward.1} parent=0 // pred_check_branch
    %14 = sbr.rel (0) target = $region9
  $region8: #{rnn_forward.1} parent=0 // pred_region
    _
  $region9: #{rnn_forward.1} parent=0 // pred_fallthru
    _
  // Predicated region
  $region10: #{rnn_forward.1} parent=0 // pred_check
    _
  $region11: #{rnn_forward.1} parent=0 // pred_check_branch
    %16 = sbr.rel (0) target = $region13
  $region12: #{rnn_forward.1} parent=0 // pred_region
    _
  $region13: #{rnn_forward.1} parent=0 // pred_fallthru
    _
  // Predicated region
  $region14: #{rnn_forward.1} parent=0 // pred_check
    _
  $region15: #{rnn_forward.1} parent=0 // pred_check_branch
    %18 = sbr.rel (0) target = $region17
  $region16: #{rnn_forward.1} parent=0 // pred_region
    _
  $region17: #{rnn_forward.1} parent=0 // pred_fallthru
    _
  // Predicated region
  $region18: #{rnn_forward.1} parent=0 // pred_check
    _
  $region19: #{rnn_forward.1} parent=0 // pred_check_branch
    %20 = sbr.rel (0) target = $region21
  $region20: #{rnn_forward.1} parent=0 // pred_region
    _
  $region21: #{rnn_forward.1} parent=0 // pred_fallthru
    _
  // Predicated region
  $region22: #{rnn_forward.1} parent=0 // pred_check
    _
  $region23: #{rnn_forward.1} parent=0 // pred_check_branch
    %22 = sbr.rel (0) target = $region25
  $region24: #{rnn_forward.1} parent=0 // pred_region
    _
  $region25: #{rnn_forward.1} parent=0 // pred_fallthru
    _
  %v23 = vld [vmem:[%s0] sm:$0xff]
  %v24 = vld [vmem:[%s0 + $0x8] sm:$0xff]
  %v25 = vld [vmem:[%s0 + $0x10] sm:$0xff]
  %v26 = vld [vmem:[%s0 + $0x18] sm:$0xff]
  %v27 = vld [vmem:[%s0 + $0x20] sm:$0xff]
  %v28 = vld [vmem:[%s0 + $0x28] sm:$0xff]
  %v29 = vld [vmem:[%s0 + $0x30] sm:$0xff]
  %v30 = vld [vmem:[%s0 + $0x38] sm:$0xff]
  %v31 = vld [vmem:[%s1] sm:$0xff]
  %v32 = vld [vmem:[%s1 + $0x8] sm:$0xff]
  %v33 = vld [vmem:[%s1 + $0x10] sm:$0xff]
  %v34 = vld [vmem:[%s1 + $0x18] sm:$0xff]
  %v35 = vld [vmem:[%s1 + $0x20] sm:$0xff]
  %v36 = vld [vmem:[%s1 + $0x28] sm:$0xff]
  %v37 = vld [vmem:[%s1 + $0x30] sm:$0xff]
  %v38 = vld [vmem:[%s1 + $0x38] sm:$0xff]
  %v39 = vld [vmem:[%s1 + $0x40] sm:$0xff]
  %v40 = vld [vmem:[%s1 + $0x48] sm:$0xff]
  %v41 = vld [vmem:[%s1 + $0x50] sm:$0xff]
  %v42 = vld [vmem:[%s1 + $0x58] sm:$0xff]
  %v43 = vld [vmem:[%s1 + $0x60] sm:$0xff]
  %v44 = vld [vmem:[%s1 + $0x68] sm:$0xff]
  %v45 = vld [vmem:[%s1 + $0x70] sm:$0xff]
  %v46 = vld [vmem:[%s1 + $0x78] sm:$0xff]
  %v47 = vld [vmem:[%s3] sm:$0x1]
  %v49 = vlaneseq
  %v50 = vshrl.u32 %v49, 7
  %v51 = vsub.s32 0, %v50
  %v52 = vrot.slane %v47, %v51
  %54 = vmatprep.subr.mxu0 0.0
  %55 = vmatpush1.msra.mxu0 %v46
  %56 = vmatprep.subr.mxu0 0.0
  %57 = vmatpush1.msra.mxu0 %v45
  %58 = vmatprep.subr.mxu0 0.0
  %59 = vmatpush1.msra.mxu0 %v44
  %60 = vmatprep.subr.mxu0 0.0
  %61 = vmatpush1.msra.mxu0 %v43
  %62 = vmatprep.subr.mxu0 0.0
  %63 = vmatpush1.msra.mxu0 %v42
  %64 = vmatprep.subr.mxu0 0.0
  %65 = vmatpush1.msra.mxu0 %v41
  %66 = vmatprep.subr.mxu0 0.0
  %67 = vmatpush1.msra.mxu0 %v40
  %68 = vmatprep.subr.mxu0 0.0
  %69 = vmatpush1.msra.mxu0 %v39
  %70 = vmatprep.subr.mxu0 0.0
  %71 = vmatpush1.msra.mxu0 %v38
  %72 = vmatprep.subr.mxu0 0.0
  %73 = vmatpush1.msra.mxu0 %v37
  %74 = vmatprep.subr.mxu0 0.0
  %75 = vmatpush1.msra.mxu0 %v36
  %76 = vmatprep.subr.mxu0 0.0
  %77 = vmatpush1.msra.mxu0 %v35
  %78 = vmatprep.subr.mxu0 0.0
  %79 = vmatpush1.msra.mxu0 %v34
  %80 = vmatprep.subr.mxu0 0.0
  %81 = vmatpush1.msra.mxu0 %v33
  %82 = vmatprep.subr.mxu0 0.0
  %83 = vmatpush1.msra.mxu0 %v32
  %84 = vmatprep.subr.mxu0 0.0
  %85 = vmatpush1.msra.mxu0 %v31
  %86 = vmatprep.subr.mxu0 0.0
  %87 = vmatpush2.msra.mxu0 0.0
  %88 = vmatprep.subr.mxu0 0.0
  %89 = vmatpush2.msra.mxu0 0.0
  %90 = vmatprep.subr.mxu0 0.0
  %91 = vmatpush2.msra.mxu0 0.0
  %92 = vmatprep.subr.mxu0 0.0
  %93 = vmatpush2.msra.mxu0 0.0
  %94 = vmatprep.subr.mxu0 0.0
  %95 = vmatpush2.msra.mxu0 0.0
  %96 = vmatprep.subr.mxu0 0.0
  %97 = vmatpush2.msra.mxu0 0.0
  %98 = vmatprep.subr.mxu0 0.0
  %99 = vmatpush2.msra.mxu0 0.0
  %100 = vmatprep.subr.mxu0 0.0
  %101 = vmatpush2.msra.mxu0 0.0
  %102 = vmatprep.subr.mxu0 0.0
  %103 = vmatpush2.msra.mxu0 0.0
  %104 = vmatprep.subr.mxu0 0.0
  %105 = vmatpush2.msra.mxu0 0.0
  %106 = vmatprep.subr.mxu0 0.0
  %107 = vmatpush2.msra.mxu0 0.0
  %108 = vmatprep.subr.mxu0 0.0
  %109 = vmatpush2.msra.mxu0 0.0
  %110 = vmatprep.subr.mxu0 0.0
  %111 = vmatpush2.msra.mxu0 0.0
  %112 = vmatprep.subr.mxu0 0.0
  %113 = vmatpush2.msra.mxu0 0.0
  %114 = vmatprep.subr.mxu0 0.0
  %115 = vmatpush2.msra.mxu0 0.0
  %116 = vmatprep.subr.mxu0 0.0
  %117 = vmatpush2.msra.mxu0 0.0
  %118 = vmatprep.mubr.f32.mxu0 0.0
  %119 = vmatmul.mubr.f32.gmra.mxu0 %v23
  %v120 = vpop.f32.mrf.mxu0
  %v121 = vadd.f32 %v52, %v120
  %v122 = vpop.f32.mrf.mxu0
  %123 = vmatprep.mubr.f32.mxu0 0.0
  %124 = vmatmul.mubr.f32.gmra.mxu0 %v24
  %v125 = vpop.f32.mrf.mxu0
  %v126 = vadd.f32 %v52, %v125
  %v127 = vpop.f32.mrf.mxu0
  %128 = vmatprep.mubr.f32.mxu0 0.0
  %129 = vmatmul.mubr.f32.gmra.mxu0 %v25
  %v130 = vpop.f32.mrf.mxu0
  %v131 = vadd.f32 %v52, %v130
  %v132 = vpop.f32.mrf.mxu0
  %133 = vmatprep.mubr.f32.mxu0 0.0
  %134 = vmatmul.mubr.f32.gmra.mxu0 %v26
  %v135 = vpop.f32.mrf.mxu0
  %v136 = vadd.f32 %v52, %v135
  %v137 = vpop.f32.mrf.mxu0
  %138 = vmatprep.mubr.f32.mxu0 0.0
  %139 = vmatmul.mubr.f32.gmra.mxu0 %v27
  %v140 = vpop.f32.mrf.mxu0
  %v141 = vadd.f32 %v52, %v140
  %v142 = vpop.f32.mrf.mxu0
  %143 = vmatprep.mubr.f32.mxu0 0.0
  %144 = vmatmul.mubr.f32.gmra.mxu0 %v28
  %v145 = vpop.f32.mrf.mxu0
  %v146 = vadd.f32 %v52, %v145
  %v147 = vpop.f32.mrf.mxu0
  %148 = vmatprep.mubr.f32.mxu0 0.0
  %149 = vmatmul.mubr.f32.gmra.mxu0 %v29
  %v150 = vpop.f32.mrf.mxu0
  %v151 = vadd.f32 %v52, %v150
  %v152 = vpop.f32.mrf.mxu0
  %153 = vmatprep.mubr.f32.mxu0 0.0
  %154 = vmatmul.mubr.f32.gmra.mxu0 %v30
  %v155 = vpop.f32.mrf.mxu0
  %v156 = vadd.f32 %v52, %v155
  %v157 = vpop.f32.mrf.mxu0
  %158 = vdwg.mxu0
  %159 = vst [vmem:[#allocation2] sm:$0xff] %v121
  %160 = vst [vmem:[#allocation2 + $0x8] sm:$0xff] %v126
  %161 = vst [vmem:[#allocation2 + $0x10] sm:$0xff] %v131
  %162 = vst [vmem:[#allocation2 + $0x18] sm:$0xff] %v136
  %163 = vst [vmem:[#allocation2 + $0x20] sm:$0xff] %v141
  %164 = vst [vmem:[#allocation2 + $0x28] sm:$0xff] %v146
  %165 = vst [vmem:[#allocation2 + $0x30] sm:$0xff] %v151
  %166 = vst [vmem:[#allocation2 + $0x38] sm:$0xff] %v156
  %v167 = vld [vmem:[%s2] sm:$0xff]
  %v168 = vld [vmem:[%s2 + $0x8] sm:$0xff]
  %v169 = vld [vmem:[%s2 + $0x10] sm:$0xff]
  %v170 = vld [vmem:[%s2 + $0x18] sm:$0xff]
  %v171 = vld [vmem:[%s2 + $0x20] sm:$0xff]
  %v172 = vld [vmem:[%s2 + $0x28] sm:$0xff]
  %v173 = vld [vmem:[%s2 + $0x30] sm:$0xff]
  %v174 = vld [vmem:[%s2 + $0x38] sm:$0xff]
  %v175 = vld [vmem:[%s2 + $0x40] sm:$0xff]
  %v176 = vld [vmem:[%s2 + $0x48] sm:$0xff]
  %v177 = vld [vmem:[%s2 + $0x50] sm:$0xff]
  %v178 = vld [vmem:[%s2 + $0x58] sm:$0xff]
  %v179 = vld [vmem:[%s2 + $0x60] sm:$0xff]
  %v180 = vld [vmem:[%s2 + $0x68] sm:$0xff]
  %v181 = vld [vmem:[%s2 + $0x70] sm:$0xff]
  %v182 = vld [vmem:[%s2 + $0x78] sm:$0xff]
  %v183 = vld [vmem:[#allocation2] sm:$0xff]
  %184 = vmatprep.subr.mxu0 0.0
  %185 = vmatpush1.msra.mxu0 %v182
  %186 = vmatprep.subr.mxu0 0.0
  %187 = vmatpush1.msra.mxu0 %v181
  %188 = vmatprep.subr.mxu0 0.0
  %189 = vmatpush1.msra.mxu0 %v180
  %190 = vmatprep.subr.mxu0 0.0
  %191 = vmatpush1.msra.mxu0 %v179
  %192 = vmatprep.subr.mxu0 0.0
  %193 = vmatpush1.msra.mxu0 %v178
  %194 = vmatprep.subr.mxu0 0.0
  %195 = vmatpush1.msra.mxu0 %v177
  %196 = vmatprep.subr.mxu0 0.0
  %197 = vmatpush1.msra.mxu0 %v176
  %198 = vmatprep.subr.mxu0 0.0
  %199 = vmatpush1.msra.mxu0 %v175
  %200 = vmatprep.subr.mxu0 0.0
  %201 = vmatpush1.msra.mxu0 %v174
  %202 = vmatprep.subr.mxu0 0.0
  %203 = vmatpush1.msra.mxu0 %v173
  %204 = vmatprep.subr.mxu0 0.0
  %205 = vmatpush1.msra.mxu0 %v172
  %206 = vmatprep.subr.mxu0 0.0
  %207 = vmatpush1.msra.mxu0 %v171
  %208 = vmatprep.subr.mxu0 0.0
  %209 = vmatpush1.msra.mxu0 %v170
  %210 = vmatprep.subr.mxu0 0.0
  %211 = vmatpush1.msra.mxu0 %v169
  %212 = vmatprep.subr.mxu0 0.0
  %213 = vmatpush1.msra.mxu0 %v168
  %214 = vmatprep.subr.mxu0 0.0
  %215 = vmatpush1.msra.mxu0 %v167
  %216 = vmatprep.subr.mxu0 0.0
  %217 = vmatpush2.msra.mxu0 0.0
  %218 = vmatprep.subr.mxu0 0.0
  %219 = vmatpush2.msra.mxu0 0.0
  %220 = vmatprep.subr.mxu0 0.0
  %221 = vmatpush2.msra.mxu0 0.0
  %222 = vmatprep.subr.mxu0 0.0
  %223 = vmatpush2.msra.mxu0 0.0
  %224 = vmatprep.subr.mxu0 0.0
  %225 = vmatpush2.msra.mxu0 0.0
  %226 = vmatprep.subr.mxu0 0.0
  %227 = vmatpush2.msra.mxu0 0.0
  %228 = vmatprep.subr.mxu0 0.0
  %229 = vmatpush2.msra.mxu0 0.0
  %230 = vmatprep.subr.mxu0 0.0
  %231 = vmatpush2.msra.mxu0 0.0
  %232 = vmatprep.subr.mxu0 0.0
  %233 = vmatpush2.msra.mxu0 0.0
  %234 = vmatprep.subr.mxu0 0.0
  %235 = vmatpush2.msra.mxu0 0.0
  %236 = vmatprep.subr.mxu0 0.0
  %237 = vmatpush2.msra.mxu0 0.0
  %238 = vmatprep.subr.mxu0 0.0
  %239 = vmatpush2.msra.mxu0 0.0
  %240 = vmatprep.subr.mxu0 0.0
  %241 = vmatpush2.msra.mxu0 0.0
  %242 = vmatprep.subr.mxu0 0.0
  %243 = vmatpush2.msra.mxu0 0.0
  %244 = vmatprep.subr.mxu0 0.0
  %245 = vmatpush2.msra.mxu0 0.0
  %246 = vmatprep.subr.mxu0 0.0
  %247 = vmatpush2.msra.mxu0 0.0
  %248 = vmatprep.mubr.f32.mxu0 0.0
  %249 = vmatmul.mubr.f32.gmra.mxu0 0.0
  %v250 = vpop.f32.mrf.mxu0
  %v251 = vadd.f32 0.0, %v250
  %v252 = vpop.f32.mrf.mxu0
  %253 = vdwg.mxu0
  %v254 = vadd.f32 %v183, %v251
  %v255 = vtanh.pop %v254
  %s256 = scalar_lea.vmem [#allocation2], 8
  %v257 = vld [vmem:[%s256] sm:$0xff]
  %258 = vmatprep.subr.mxu0 0.0
  %259 = vmatpush1.msra.mxu0 %v182
  %260 = vmatprep.subr.mxu0 0.0
  %261 = vmatpush1.msra.mxu0 %v181
  %262 = vmatprep.subr.mxu0 0.0
  %263 = vmatpush1.msra.mxu0 %v180
  %264 = vmatprep.subr.mxu0 0.0
  %265 = vmatpush1.msra.mxu0 %v179
  %266 = vmatprep.subr.mxu0 0.0
  %267 = vmatpush1.msra.mxu0 %v178
  %268 = vmatprep.subr.mxu0 0.0
  %269 = vmatpush1.msra.mxu0 %v177
  %270 = vmatprep.subr.mxu0 0.0
  %271 = vmatpush1.msra.mxu0 %v176
  %272 = vmatprep.subr.mxu0 0.0
  %273 = vmatpush1.msra.mxu0 %v175
  %274 = vmatprep.subr.mxu0 0.0
  %275 = vmatpush1.msra.mxu0 %v174
  %276 = vmatprep.subr.mxu0 0.0
  %277 = vmatpush1.msra.mxu0 %v173
  %278 = vmatprep.subr.mxu0 0.0
  %279 = vmatpush1.msra.mxu0 %v172
  %280 = vmatprep.subr.mxu0 0.0
  %281 = vmatpush1.msra.mxu0 %v171
  %282 = vmatprep.subr.mxu0 0.0
  %283 = vmatpush1.msra.mxu0 %v170
  %284 = vmatprep.subr.mxu0 0.0
  %285 = vmatpush1.msra.mxu0 %v169
  %286 = vmatprep.subr.mxu0 0.0
  %287 = vmatpush1.msra.mxu0 %v168
  %288 = vmatprep.subr.mxu0 0.0
  %289 = vmatpush1.msra.mxu0 %v167
  %290 = vmatprep.subr.mxu0 0.0
  %291 = vmatpush2.msra.mxu0 0.0
  %292 = vmatprep.subr.mxu0 0.0
  %293 = vmatpush2.msra.mxu0 0.0
  %294 = vmatprep.subr.mxu0 0.0
  %295 = vmatpush2.msra.mxu0 0.0
  %296 = vmatprep.subr.mxu0 0.0
  %297 = vmatpush2.msra.mxu0 0.0
  %298 = vmatprep.subr.mxu0 0.0
  %299 = vmatpush2.msra.mxu0 0.0
  %300 = vmatprep.subr.mxu0 0.0
  %301 = vmatpush2.msra.mxu0 0.0
  %302 = vmatprep.subr.mxu0 0.0
  %303 = vmatpush2.msra.mxu0 0.0
  %304 = vmatprep.subr.mxu0 0.0
  %305 = vmatpush2.msra.mxu0 0.0
  %306 = vmatprep.subr.mxu0 0.0
  %307 = vmatpush2.msra.mxu0 0.0
  %308 = vmatprep.subr.mxu0 0.0
  %309 = vmatpush2.msra.mxu0 0.0
  %310 = vmatprep.subr.mxu0 0.0
  %311 = vmatpush2.msra.mxu0 0.0
  %312 = vmatprep.subr.mxu0 0.0
  %313 = vmatpush2.msra.mxu0 0.0
  %314 = vmatprep.subr.mxu0 0.0
  %315 = vmatpush2.msra.mxu0 0.0
  %316 = vmatprep.subr.mxu0 0.0
  %317 = vmatpush2.msra.mxu0 0.0
  %318 = vmatprep.subr.mxu0 0.0
  %319 = vmatpush2.msra.mxu0 0.0
  %320 = vmatprep.subr.mxu0 0.0
  %321 = vmatpush2.msra.mxu0 0.0
  %322 = vmatprep.mubr.f32.mxu0 0.0
  %323 = vmatmul.mubr.f32.gmra.mxu0 %v255
  %v324 = vpop.f32.mrf.mxu0
  %v325 = vadd.f32 0.0, %v324
  %v326 = vpop.f32.mrf.mxu0
  %327 = vdwg.mxu0
  %v328 = vadd.f32 %v257, %v325
  %v329 = vtanh.pop %v328
  %s330 = scalar_lea.vmem [#allocation2], 16
  %v331 = vld [vmem:[%s330] sm:$0xff]
  %332 = vmatprep.subr.mxu0 0.0
  %333 = vmatpush1.msra.mxu0 %v182
  %334 = vmatprep.subr.mxu0 0.0
  %335 = vmatpush1.msra.mxu0 %v181
  %336 = vmatprep.subr.mxu0 0.0
  %337 = vmatpush1.msra.mxu0 %v180
  %338 = vmatprep.subr.mxu0 0.0
  %339 = vmatpush1.msra.mxu0 %v179
  %340 = vmatprep.subr.mxu0 0.0
  %341 = vmatpush1.msra.mxu0 %v178
  %342 = vmatprep.subr.mxu0 0.0
  %343 = vmatpush1.msra.mxu0 %v177
  %344 = vmatprep.subr.mxu0 0.0
  %345 = vmatpush1.msra.mxu0 %v176
  %346 = vmatprep.subr.mxu0 0.0
  %347 = vmatpush1.msra.mxu0 %v175
  %348 = vmatprep.subr.mxu0 0.0
  %349 = vmatpush1.msra.mxu0 %v174
  %350 = vmatprep.subr.mxu0 0.0
  %351 = vmatpush1.msra.mxu0 %v173
  %352 = vmatprep.subr.mxu0 0.0
  %353 = vmatpush1.msra.mxu0 %v172
  %354 = vmatprep.subr.mxu0 0.0
  %355 = vmatpush1.msra.mxu0 %v171
  %356 = vmatprep.subr.mxu0 0.0
  %357 = vmatpush1.msra.mxu0 %v170
  %358 = vmatprep.subr.mxu0 0.0
  %359 = vmatpush1.msra.mxu0 %v169
  %360 = vmatprep.subr.mxu0 0.0
  %361 = vmatpush1.msra.mxu0 %v168
  %362 = vmatprep.subr.mxu0 0.0
  %363 = vmatpush1.msra.mxu0 %v167
  %364 = vmatprep.subr.mxu0 0.0
  %365 = vmatpush2.msra.mxu0 0.0
  %366 = vmatprep.subr.mxu0 0.0
  %367 = vmatpush2.msra.mxu0 0.0
  %368 = vmatprep.subr.mxu0 0.0
  %369 = vmatpush2.msra.mxu0 0.0
  %370 = vmatprep.subr.mxu0 0.0
  %371 = vmatpush2.msra.mxu0 0.0
  %372 = vmatprep.subr.mxu0 0.0
  %373 = vmatpush2.msra.mxu0 0.0
  %374 = vmatprep.subr.mxu0 0.0
  %375 = vmatpush2.msra.mxu0 0.0
  %376 = vmatprep.subr.mxu0 0.0
  %377 = vmatpush2.msra.mxu0 0.0
  %378 = vmatprep.subr.mxu0 0.0
  %379 = vmatpush2.msra.mxu0 0.0
  %380 = vmatprep.subr.mxu0 0.0
  %381 = vmatpush2.msra.mxu0 0.0
  %382 = vmatprep.subr.mxu0 0.0
  %383 = vmatpush2.msra.mxu0 0.0
  %384 = vmatprep.subr.mxu0 0.0
  %385 = vmatpush2.msra.mxu0 0.0
  %386 = vmatprep.subr.mxu0 0.0
  %387 = vmatpush2.msra.mxu0 0.0
  %388 = vmatprep.subr.mxu0 0.0
  %389 = vmatpush2.msra.mxu0 0.0
  %390 = vmatprep.subr.mxu0 0.0
  %391 = vmatpush2.msra.mxu0 0.0
  %392 = vmatprep.subr.mxu0 0.0
  %393 = vmatpush2.msra.mxu0 0.0
  %394 = vmatprep.subr.mxu0 0.0
  %395 = vmatpush2.msra.mxu0 0.0
  %396 = vmatprep.mubr.f32.mxu0 0.0
  %397 = vmatmul.mubr.f32.gmra.mxu0 %v329
  %v398 = vpop.f32.mrf.mxu0
  %v399 = vadd.f32 0.0, %v398
  %v400 = vpop.f32.mrf.mxu0
  %401 = vdwg.mxu0
  %v402 = vadd.f32 %v331, %v399
  %v403 = vtanh.pop %v402
  %s404 = scalar_lea.vmem [#allocation2], 24
  %v405 = vld [vmem:[%s404] sm:$0xff]
  %406 = vmatprep.subr.mxu0 0.0
  %407 = vmatpush1.msra.mxu0 %v182
  %408 = vmatprep.subr.mxu0 0.0
  %409 = vmatpush1.msra.mxu0 %v181
  %410 = vmatprep.subr.mxu0 0.0
  %411 = vmatpush1.msra.mxu0 %v180
  %412 = vmatprep.subr.mxu0 0.0
  %413 = vmatpush1.msra.mxu0 %v179
  %414 = vmatprep.subr.mxu0 0.0
  %415 = vmatpush1.msra.mxu0 %v178
  %416 = vmatprep.subr.mxu0 0.0
  %417 = vmatpush1.msra.mxu0 %v177
  %418 = vmatprep.subr.mxu0 0.0
  %419 = vmatpush1.msra.mxu0 %v176
  %420 = vmatprep.subr.mxu0 0.0
  %421 = vmatpush1.msra.mxu0 %v175
  %422 = vmatprep.subr.mxu0 0.0
  %423 = vmatpush1.msra.mxu0 %v174
  %424 = vmatprep.subr.mxu0 0.0
  %425 = vmatpush1.msra.mxu0 %v173
  %426 = vmatprep.subr.mxu0 0.0
  %427 = vmatpush1.msra.mxu0 %v172
  %428 = vmatprep.subr.mxu0 0.0
  %429 = vmatpush1.msra.mxu0 %v171
  %430 = vmatprep.subr.mxu0 0.0
  %431 = vmatpush1.msra.mxu0 %v170
  %432 = vmatprep.subr.mxu0 0.0
  %433 = vmatpush1.msra.mxu0 %v169
  %434 = vmatprep.subr.mxu0 0.0
  %435 = vmatpush1.msra.mxu0 %v168
  %436 = vmatprep.subr.mxu0 0.0
  %437 = vmatpush1.msra.mxu0 %v167
  %438 = vmatprep.subr.mxu0 0.0
  %439 = vmatpush2.msra.mxu0 0.0
  %440 = vmatprep.subr.mxu0 0.0
  %441 = vmatpush2.msra.mxu0 0.0
  %442 = vmatprep.subr.mxu0 0.0
  %443 = vmatpush2.msra.mxu0 0.0
  %444 = vmatprep.subr.mxu0 0.0
  %445 = vmatpush2.msra.mxu0 0.0
  %446 = vmatprep.subr.mxu0 0.0
  %447 = vmatpush2.msra.mxu0 0.0
  %448 = vmatprep.subr.mxu0 0.0
  %449 = vmatpush2.msra.mxu0 0.0
  %450 = vmatprep.subr.mxu0 0.0
  %451 = vmatpush2.msra.mxu0 0.0
  %452 = vmatprep.subr.mxu0 0.0
  %453 = vmatpush2.msra.mxu0 0.0
  %454 = vmatprep.subr.mxu0 0.0
  %455 = vmatpush2.msra.mxu0 0.0
  %456 = vmatprep.subr.mxu0 0.0
  %457 = vmatpush2.msra.mxu0 0.0
  %458 = vmatprep.subr.mxu0 0.0
  %459 = vmatpush2.msra.mxu0 0.0
  %460 = vmatprep.subr.mxu0 0.0
  %461 = vmatpush2.msra.mxu0 0.0
  %462 = vmatprep.subr.mxu0 0.0
  %463 = vmatpush2.msra.mxu0 0.0
  %464 = vmatprep.subr.mxu0 0.0
  %465 = vmatpush2.msra.mxu0 0.0
  %466 = vmatprep.subr.mxu0 0.0
  %467 = vmatpush2.msra.mxu0 0.0
  %468 = vmatprep.subr.mxu0 0.0
  %469 = vmatpush2.msra.mxu0 0.0
  %470 = vmatprep.mubr.f32.mxu0 0.0
  %471 = vmatmul.mubr.f32.gmra.mxu0 %v403
  %v472 = vpop.f32.mrf.mxu0
  %v473 = vadd.f32 0.0, %v472
  %v474 = vpop.f32.mrf.mxu0
  %475 = vdwg.mxu0
  %v476 = vadd.f32 %v405, %v473
  %v477 = vtanh.pop %v476
  %s478 = scalar_lea.vmem [#allocation2], 32
  %v479 = vld [vmem:[%s478] sm:$0xff]
  %480 = vmatprep.subr.mxu0 0.0
  %481 = vmatpush1.msra.mxu0 %v182
  %482 = vmatprep.subr.mxu0 0.0
  %483 = vmatpush1.msra.mxu0 %v181
  %484 = vmatprep.subr.mxu0 0.0
  %485 = vmatpush1.msra.mxu0 %v180
  %486 = vmatprep.subr.mxu0 0.0
  %487 = vmatpush1.msra.mxu0 %v179
  %488 = vmatprep.subr.mxu0 0.0
  %489 = vmatpush1.msra.mxu0 %v178
  %490 = vmatprep.subr.mxu0 0.0
  %491 = vmatpush1.msra.mxu0 %v177
  %492 = vmatprep.subr.mxu0 0.0
  %493 = vmatpush1.msra.mxu0 %v176
  %494 = vmatprep.subr.mxu0 0.0
  %495 = vmatpush1.msra.mxu0 %v175
  %496 = vmatprep.subr.mxu0 0.0
  %497 = vmatpush1.msra.mxu0 %v174
  %498 = vmatprep.subr.mxu0 0.0
  %499 = vmatpush1.msra.mxu0 %v173
  %500 = vmatprep.subr.mxu0 0.0
  %501 = vmatpush1.msra.mxu0 %v172
  %502 = vmatprep.subr.mxu0 0.0
  %503 = vmatpush1.msra.mxu0 %v171
  %504 = vmatprep.subr.mxu0 0.0
  %505 = vmatpush1.msra.mxu0 %v170
  %506 = vmatprep.subr.mxu0 0.0
  %507 = vmatpush1.msra.mxu0 %v169
  %508 = vmatprep.subr.mxu0 0.0
  %509 = vmatpush1.msra.mxu0 %v168
  %510 = vmatprep.subr.mxu0 0.0
  %511 = vmatpush1.msra.mxu0 %v167
  %512 = vmatprep.subr.mxu0 0.0
  %513 = vmatpush2.msra.mxu0 0.0
  %514 = vmatprep.subr.mxu0 0.0
  %515 = vmatpush2.msra.mxu0 0.0
  %516 = vmatprep.subr.mxu0 0.0
  %517 = vmatpush2.msra.mxu0 0.0
  %518 = vmatprep.subr.mxu0 0.0
  %519 = vmatpush2.msra.mxu0 0.0
  %520 = vmatprep.subr.mxu0 0.0
  %521 = vmatpush2.msra.mxu0 0.0
  %522 = vmatprep.subr.mxu0 0.0
  %523 = vmatpush2.msra.mxu0 0.0
  %524 = vmatprep.subr.mxu0 0.0
  %525 = vmatpush2.msra.mxu0 0.0
  %526 = vmatprep.subr.mxu0 0.0
  %527 = vmatpush2.msra.mxu0 0.0
  %528 = vmatprep.subr.mxu0 0.0
  %529 = vmatpush2.msra.mxu0 0.0
  %530 = vmatprep.subr.mxu0 0.0
  %531 = vmatpush2.msra.mxu0 0.0
  %532 = vmatprep.subr.mxu0 0.0
  %533 = vmatpush2.msra.mxu0 0.0
  %534 = vmatprep.subr.mxu0 0.0
  %535 = vmatpush2.msra.mxu0 0.0
  %536 = vmatprep.subr.mxu0 0.0
  %537 = vmatpush2.msra.mxu0 0.0
  %538 = vmatprep.subr.mxu0 0.0
  %539 = vmatpush2.msra.mxu0 0.0
  %540 = vmatprep.subr.mxu0 0.0
  %541 = vmatpush2.msra.mxu0 0.0
  %542 = vmatprep.subr.mxu0 0.0
  %543 = vmatpush2.msra.mxu0 0.0
  %544 = vmatprep.mubr.f32.mxu0 0.0
  %545 = vmatmul.mubr.f32.gmra.mxu0 %v477
  %v546 = vpop.f32.mrf.mxu0
  %v547 = vadd.f32 0.0, %v546
  %v548 = vpop.f32.mrf.mxu0
  %549 = vdwg.mxu0
  %v550 = vadd.f32 %v479, %v547
  %v551 = vtanh.pop %v550
  %s552 = scalar_lea.vmem [#allocation2], 40
  %v553 = vld [vmem:[%s552] sm:$0xff]
  %554 = vmatprep.subr.mxu0 0.0
  %555 = vmatpush1.msra.mxu0 %v182
  %556 = vmatprep.subr.mxu0 0.0
  %557 = vmatpush1.msra.mxu0 %v181
  %558 = vmatprep.subr.mxu0 0.0
  %559 = vmatpush1.msra.mxu0 %v180
  %560 = vmatprep.subr.mxu0 0.0
  %561 = vmatpush1.msra.mxu0 %v179
  %562 = vmatprep.subr.mxu0 0.0
  %563 = vmatpush1.msra.mxu0 %v178
  %564 = vmatprep.subr.mxu0 0.0
  %565 = vmatpush1.msra.mxu0 %v177
  %566 = vmatprep.subr.mxu0 0.0
  %567 = vmatpush1.msra.mxu0 %v176
  %568 = vmatprep.subr.mxu0 0.0
  %569 = vmatpush1.msra.mxu0 %v175
  %570 = vmatprep.subr.mxu0 0.0
  %571 = vmatpush1.msra.mxu0 %v174
  %572 = vmatprep.subr.mxu0 0.0
  %573 = vmatpush1.msra.mxu0 %v173
  %574 = vmatprep.subr.mxu0 0.0
  %575 = vmatpush1.msra.mxu0 %v172
  %576 = vmatprep.subr.mxu0 0.0
  %577 = vmatpush1.msra.mxu0 %v171
  %578 = vmatprep.subr.mxu0 0.0
  %579 = vmatpush1.msra.mxu0 %v170
  %580 = vmatprep.subr.mxu0 0.0
  %581 = vmatpush1.msra.mxu0 %v169
  %582 = vmatprep.subr.mxu0 0.0
  %583 = vmatpush1.msra.mxu0 %v168
  %584 = vmatprep.subr.mxu0 0.0
  %585 = vmatpush1.msra.mxu0 %v167
  %586 = vmatprep.subr.mxu0 0.0
  %587 = vmatpush2.msra.mxu0 0.0
  %588 = vmatprep.subr.mxu0 0.0
  %589 = vmatpush2.msra.mxu0 0.0
  %590 = vmatprep.subr.mxu0 0.0
  %591 = vmatpush2.msra.mxu0 0.0
  %592 = vmatprep.subr.mxu0 0.0
  %593 = vmatpush2.msra.mxu0 0.0
  %594 = vmatprep.subr.mxu0 0.0
  %595 = vmatpush2.msra.mxu0 0.0
  %596 = vmatprep.subr.mxu0 0.0
  %597 = vmatpush2.msra.mxu0 0.0
  %598 = vmatprep.subr.mxu0 0.0
  %599 = vmatpush2.msra.mxu0 0.0
  %600 = vmatprep.subr.mxu0 0.0
  %601 = vmatpush2.msra.mxu0 0.0
  %602 = vmatprep.subr.mxu0 0.0
  %603 = vmatpush2.msra.mxu0 0.0
  %604 = vmatprep.subr.mxu0 0.0
  %605 = vmatpush2.msra.mxu0 0.0
  %606 = vmatprep.subr.mxu0 0.0
  %607 = vmatpush2.msra.mxu0 0.0
  %608 = vmatprep.subr.mxu0 0.0
  %609 = vmatpush2.msra.mxu0 0.0
  %610 = vmatprep.subr.mxu0 0.0
  %611 = vmatpush2.msra.mxu0 0.0
  %612 = vmatprep.subr.mxu0 0.0
  %613 = vmatpush2.msra.mxu0 0.0
  %614 = vmatprep.subr.mxu0 0.0
  %615 = vmatpush2.msra.mxu0 0.0
  %616 = vmatprep.subr.mxu0 0.0
  %617 = vmatpush2.msra.mxu0 0.0
  %618 = vmatprep.mubr.f32.mxu0 0.0
  %619 = vmatmul.mubr.f32.gmra.mxu0 %v551
  %v620 = vpop.f32.mrf.mxu0
  %v621 = vadd.f32 0.0, %v620
  %v622 = vpop.f32.mrf.mxu0
  %623 = vdwg.mxu0
  %v624 = vadd.f32 %v553, %v621
  %v625 = vtanh.pop %v624
  %s626 = scalar_lea.vmem [#allocation2], 48
  %v627 = vld [vmem:[%s626] sm:$0xff]
  %628 = vmatprep.subr.mxu0 0.0
  %629 = vmatpush1.msra.mxu0 %v182
  %630 = vmatprep.subr.mxu0 0.0
  %631 = vmatpush1.msra.mxu0 %v181
  %632 = vmatprep.subr.mxu0 0.0
  %633 = vmatpush1.msra.mxu0 %v180
  %634 = vmatprep.subr.mxu0 0.0
  %635 = vmatpush1.msra.mxu0 %v179
  %636 = vmatprep.subr.mxu0 0.0
  %637 = vmatpush1.msra.mxu0 %v178
  %638 = vmatprep.subr.mxu0 0.0
  %639 = vmatpush1.msra.mxu0 %v177
  %640 = vmatprep.subr.mxu0 0.0
  %641 = vmatpush1.msra.mxu0 %v176
  %642 = vmatprep.subr.mxu0 0.0
  %643 = vmatpush1.msra.mxu0 %v175
  %644 = vmatprep.subr.mxu0 0.0
  %645 = vmatpush1.msra.mxu0 %v174
  %646 = vmatprep.subr.mxu0 0.0
  %647 = vmatpush1.msra.mxu0 %v173
  %648 = vmatprep.subr.mxu0 0.0
  %649 = vmatpush1.msra.mxu0 %v172
  %650 = vmatprep.subr.mxu0 0.0
  %651 = vmatpush1.msra.mxu0 %v171
  %652 = vmatprep.subr.mxu0 0.0
  %653 = vmatpush1.msra.mxu0 %v170
  %654 = vmatprep.subr.mxu0 0.0
  %655 = vmatpush1.msra.mxu0 %v169
  %656 = vmatprep.subr.mxu0 0.0
  %657 = vmatpush1.msra.mxu0 %v168
  %658 = vmatprep.subr.mxu0 0.0
  %659 = vmatpush1.msra.mxu0 %v167
  %660 = vmatprep.subr.mxu0 0.0
  %661 = vmatpush2.msra.mxu0 0.0
  %662 = vmatprep.subr.mxu0 0.0
  %663 = vmatpush2.msra.mxu0 0.0
  %664 = vmatprep.subr.mxu0 0.0
  %665 = vmatpush2.msra.mxu0 0.0
  %666 = vmatprep.subr.mxu0 0.0
  %667 = vmatpush2.msra.mxu0 0.0
  %668 = vmatprep.subr.mxu0 0.0
  %669 = vmatpush2.msra.mxu0 0.0
  %670 = vmatprep.subr.mxu0 0.0
  %671 = vmatpush2.msra.mxu0 0.0
  %672 = vmatprep.subr.mxu0 0.0
  %673 = vmatpush2.msra.mxu0 0.0
  %674 = vmatprep.subr.mxu0 0.0
  %675 = vmatpush2.msra.mxu0 0.0
  %676 = vmatprep.subr.mxu0 0.0
  %677 = vmatpush2.msra.mxu0 0.0
  %678 = vmatprep.subr.mxu0 0.0
  %679 = vmatpush2.msra.mxu0 0.0
  %680 = vmatprep.subr.mxu0 0.0
  %681 = vmatpush2.msra.mxu0 0.0
  %682 = vmatprep.subr.mxu0 0.0
  %683 = vmatpush2.msra.mxu0 0.0
  %684 = vmatprep.subr.mxu0 0.0
  %685 = vmatpush2.msra.mxu0 0.0
  %686 = vmatprep.subr.mxu0 0.0
  %687 = vmatpush2.msra.mxu0 0.0
  %688 = vmatprep.subr.mxu0 0.0
  %689 = vmatpush2.msra.mxu0 0.0
  %690 = vmatprep.subr.mxu0 0.0
  %691 = vmatpush2.msra.mxu0 0.0
  %692 = vmatprep.mubr.f32.mxu0 0.0
  %693 = vmatmul.mubr.f32.gmra.mxu0 %v625
  %v694 = vpop.f32.mrf.mxu0
  %v695 = vadd.f32 0.0, %v694
  %v696 = vpop.f32.mrf.mxu0
  %697 = vdwg.mxu0
  %v698 = vadd.f32 %v627, %v695
  %v699 = vtanh.pop %v698
  %s700 = scalar_lea.vmem [#allocation2], 56
  %v701 = vld [vmem:[%s700] sm:$0xff]
  %702 = vmatprep.subr.mxu0 0.0
  %703 = vmatpush1.msra.mxu0 %v182
  %704 = vmatprep.subr.mxu0 0.0
  %705 = vmatpush1.msra.mxu0 %v181
  %706 = vmatprep.subr.mxu0 0.0
  %707 = vmatpush1.msra.mxu0 %v180
  %708 = vmatprep.subr.mxu0 0.0
  %709 = vmatpush1.msra.mxu0 %v179
  %710 = vmatprep.subr.mxu0 0.0
  %711 = vmatpush1.msra.mxu0 %v178
  %712 = vmatprep.subr.mxu0 0.0
  %713 = vmatpush1.msra.mxu0 %v177
  %714 = vmatprep.subr.mxu0 0.0
  %715 = vmatpush1.msra.mxu0 %v176
  %716 = vmatprep.subr.mxu0 0.0
  %717 = vmatpush1.msra.mxu0 %v175
  %718 = vmatprep.subr.mxu0 0.0
  %719 = vmatpush1.msra.mxu0 %v174
  %720 = vmatprep.subr.mxu0 0.0
  %721 = vmatpush1.msra.mxu0 %v173
  %722 = vmatprep.subr.mxu0 0.0
  %723 = vmatpush1.msra.mxu0 %v172
  %724 = vmatprep.subr.mxu0 0.0
  %725 = vmatpush1.msra.mxu0 %v171
  %726 = vmatprep.subr.mxu0 0.0
  %727 = vmatpush1.msra.mxu0 %v170
  %728 = vmatprep.subr.mxu0 0.0
  %729 = vmatpush1.msra.mxu0 %v169
  %730 = vmatprep.subr.mxu0 0.0
  %731 = vmatpush1.msra.mxu0 %v168
  %732 = vmatprep.subr.mxu0 0.0
  %733 = vmatpush1.msra.mxu0 %v167
  %734 = vmatprep.subr.mxu0 0.0
  %735 = vmatpush2.msra.mxu0 0.0
  %736 = vmatprep.subr.mxu0 0.0
  %737 = vmatpush2.msra.mxu0 0.0
  %738 = vmatprep.subr.mxu0 0.0
  %739 = vmatpush2.msra.mxu0 0.0
  %740 = vmatprep.subr.mxu0 0.0
  %741 = vmatpush2.msra.mxu0 0.0
  %742 = vmatprep.subr.mxu0 0.0
  %743 = vmatpush2.msra.mxu0 0.0
  %744 = vmatprep.subr.mxu0 0.0
  %745 = vmatpush2.msra.mxu0 0.0
  %746 = vmatprep.subr.mxu0 0.0
  %747 = vmatpush2.msra.mxu0 0.0
  %748 = vmatprep.subr.mxu0 0.0
  %749 = vmatpush2.msra.mxu0 0.0
  %750 = vmatprep.subr.mxu0 0.0
  %751 = vmatpush2.msra.mxu0 0.0
  %752 = vmatprep.subr.mxu0 0.0
  %753 = vmatpush2.msra.mxu0 0.0
  %754 = vmatprep.subr.mxu0 0.0
  %755 = vmatpush2.msra.mxu0 0.0
  %756 = vmatprep.subr.mxu0 0.0
  %757 = vmatpush2.msra.mxu0 0.0
  %758 = vmatprep.subr.mxu0 0.0
  %759 = vmatpush2.msra.mxu0 0.0
  %760 = vmatprep.subr.mxu0 0.0
  %761 = vmatpush2.msra.mxu0 0.0
  %762 = vmatprep.subr.mxu0 0.0
  %763 = vmatpush2.msra.mxu0 0.0
  %764 = vmatprep.subr.mxu0 0.0
  %765 = vmatpush2.msra.mxu0 0.0
  %766 = vmatprep.mubr.f32.mxu0 0.0
  %767 = vmatmul.mubr.f32.gmra.mxu0 %v699
  %v768 = vpop.f32.mrf.mxu0
  %v769 = vadd.f32 0.0, %v768
  %v770 = vpop.f32.mrf.mxu0
  %771 = vdwg.mxu0
  %v772 = vadd.f32 %v701, %v769
  %v773 = vtanh.pop %v772
  %v774 = vmax.f32 %v773, 0.0
  %v775 = vld [vmem:[%s4] sm:$0xff]
  %v776 = vld [vmem:[%s4 + $0x8] sm:$0xff]
  %v777 = vld [vmem:[%s4 + $0x10] sm:$0xff]
  %v778 = vld [vmem:[%s4 + $0x18] sm:$0xff]
  %v779 = vld [vmem:[%s4 + $0x20] sm:$0xff]
  %v780 = vld [vmem:[%s4 + $0x28] sm:$0xff]
  %v781 = vld [vmem:[%s4 + $0x30] sm:$0xff]
  %v782 = vld [vmem:[%s4 + $0x38] sm:$0xff]
  %v783 = vld [vmem:[%s4 + $0x40] sm:$0xff]
  %v784 = vld [vmem:[%s4 + $0x48] sm:$0xff]
  %v785 = vld [vmem:[%s4 + $0x50] sm:$0xff]
  %v786 = vld [vmem:[%s4 + $0x58] sm:$0xff]
  %v787 = vld [vmem:[%s4 + $0x60] sm:$0xff]
  %v788 = vld [vmem:[%s4 + $0x68] sm:$0xff]
  %v789 = vld [vmem:[%s4 + $0x70] sm:$0xff]
  %v790 = vld [vmem:[%s4 + $0x78] sm:$0xff]
  %v791 = vld [vmem:[%s5] sm:$0x1]
  %v793 = vlaneseq
  %v794 = vshrl.u32 %v793, 7
  %v795 = vsub.s32 0, %v794
  %v796 = vrot.slane %v791, %v795
  %798 = vmatprep.subr.mxu0 0.0
  %799 = vmatpush1.msra.mxu0 %v790
  %800 = vmatprep.subr.mxu0 0.0
  %801 = vmatpush1.msra.mxu0 %v789
  %802 = vmatprep.subr.mxu0 0.0
  %803 = vmatpush1.msra.mxu0 %v788
  %804 = vmatprep.subr.mxu0 0.0
  %805 = vmatpush1.msra.mxu0 %v787
  %806 = vmatprep.subr.mxu0 0.0
  %807 = vmatpush1.msra.mxu0 %v786
  %808 = vmatprep.subr.mxu0 0.0
  %809 = vmatpush1.msra.mxu0 %v785
  %810 = vmatprep.subr.mxu0 0.0
  %811 = vmatpush1.msra.mxu0 %v784
  %812 = vmatprep.subr.mxu0 0.0
  %813 = vmatpush1.msra.mxu0 %v783
  %814 = vmatprep.subr.mxu0 0.0
  %815 = vmatpush1.msra.mxu0 %v782
  %816 = vmatprep.subr.mxu0 0.0
  %817 = vmatpush1.msra.mxu0 %v781
  %818 = vmatprep.subr.mxu0 0.0
  %819 = vmatpush1.msra.mxu0 %v780
  %820 = vmatprep.subr.mxu0 0.0
  %821 = vmatpush1.msra.mxu0 %v779
  %822 = vmatprep.subr.mxu0 0.0
  %823 = vmatpush1.msra.mxu0 %v778
  %824 = vmatprep.subr.mxu0 0.0
  %825 = vmatpush1.msra.mxu0 %v777
  %826 = vmatprep.subr.mxu0 0.0
  %827 = vmatpush1.msra.mxu0 %v776
  %828 = vmatprep.subr.mxu0 0.0
  %829 = vmatpush1.msra.mxu0 %v775
  %830 = vmatprep.subr.mxu0 0.0
  %831 = vmatpush2.msra.mxu0 0.0
  %832 = vmatprep.subr.mxu0 0.0
  %833 = vmatpush2.msra.mxu0 0.0
  %834 = vmatprep.subr.mxu0 0.0
  %835 = vmatpush2.msra.mxu0 0.0
  %836 = vmatprep.subr.mxu0 0.0
  %837 = vmatpush2.msra.mxu0 0.0
  %838 = vmatprep.subr.mxu0 0.0
  %839 = vmatpush2.msra.mxu0 0.0
  %840 = vmatprep.subr.mxu0 0.0
  %841 = vmatpush2.msra.mxu0 0.0
  %842 = vmatprep.subr.mxu0 0.0
  %843 = vmatpush2.msra.mxu0 0.0
  %844 = vmatprep.subr.mxu0 0.0
  %845 = vmatpush2.msra.mxu0 0.0
  %846 = vmatprep.subr.mxu0 0.0
  %847 = vmatpush2.msra.mxu0 0.0
  %848 = vmatprep.subr.mxu0 0.0
  %849 = vmatpush2.msra.mxu0 0.0
  %850 = vmatprep.subr.mxu0 0.0
  %851 = vmatpush2.msra.mxu0 0.0
  %852 = vmatprep.subr.mxu0 0.0
  %853 = vmatpush2.msra.mxu0 0.0
  %854 = vmatprep.subr.mxu0 0.0
  %855 = vmatpush2.msra.mxu0 0.0
  %856 = vmatprep.subr.mxu0 0.0
  %857 = vmatpush2.msra.mxu0 0.0
  %858 = vmatprep.subr.mxu0 0.0
  %859 = vmatpush2.msra.mxu0 0.0
  %860 = vmatprep.subr.mxu0 0.0
  %861 = vmatpush2.msra.mxu0 0.0
  %862 = vmatprep.mubr.f32.mxu0 0.0
  %863 = vmatmul.mubr.f32.gmra.mxu0 %v774
  %v864 = vpop.f32.mrf.mxu0
  %v865 = vadd.f32 %v796, %v864
  %v866 = vpop.f32.mrf.mxu0
  %867 = vdwg.mxu0
  %868 = vst [vmem:[%s6] sm:$0xff] %v865
  // Predicated region
  $region26: #{rnn_forward.1} parent=0 // pred_check
    _
  $region27: #{rnn_forward.1} parent=0 // pred_check_branch
    %870 = sbr.rel (0) target = $region29
  $region28: #{rnn_forward.1} parent=0 // pred_region
    _
  $region29: #{rnn_forward.1} parent=0 // pred_fallthru
    _
  // Predicated region
  $region30: #{rnn_forward.1} parent=0 // pred_check
    _
  $region31: #{rnn_forward.1} parent=0 // pred_check_branch
    %872 = sbr.rel (0) target = $region33
  $region32: #{rnn_forward.1} parent=0 // pred_region
    _
  $region33: #{rnn_forward.1} parent=0 // pred_fallthru
    _

</llo_original>
